<compile_context>
chip_gen: v5e
topology: v5e:2x2
jax: 0.10.0
libtpu: 0.0.40
codegen_flags: <defaults>
</compile_context>

<pallas_src>
import functools

import jax
import jax.numpy as jnp
from jax.experimental import pallas as pl
from jax.experimental.pallas import tpu as pltpu


def _round_up(n, m):
    return ((n + m - 1) // m) * m


def _cdiv(a, b):
    return -(-a // b)


# --------------------------------------------------------------------------
# One-time parameter fusion (constant work — hoist out of the hot path).
# --------------------------------------------------------------------------
def frfm_prepare_params(w_age, b_age, w_gen, b_gen, *, param_dtype=None):
    """Fuse the two nn.Linear weights into a lane-aligned (E, 2*E_pad) matrix.

    nn.Linear stores W as [out, in] and computes x @ W.T + b, so the weights
    are pre-transposed here.  Each half is placed at a multiple-of-128 column
    offset; padded columns are zero (relu(0) = 0, never read back).
    Pass param_dtype=jnp.bfloat16 for the bf16 MXU path (recommended on v5e).
    """
    E = w_age.shape[0]
    param_dtype = w_age.dtype if param_dtype is None else jnp.dtype(param_dtype)
    e_pad = _round_up(E, 128)

    w = jnp.zeros((E, 2 * e_pad), dtype=param_dtype)
    w = w.at[:, :E].set(w_age.T.astype(param_dtype))
    w = w.at[:, e_pad:e_pad + E].set(w_gen.T.astype(param_dtype))

    b = jnp.zeros((1, 2 * e_pad), dtype=jnp.float32)
    b = b.at[0, :E].set(b_age.astype(jnp.float32))
    b = b.at[0, e_pad:e_pad + E].set(b_gen.astype(jnp.float32))
    return w, b


# --------------------------------------------------------------------------
# Kernel
# --------------------------------------------------------------------------
def frfm_kernel(x_ref, w_ref, b_ref, id_ref, age_ref, gen_ref, *, E, e_pad):
    """One batch tile: fused [age|gender] linear + ReLU, then the residual."""
    x = x_ref[...]                                        # (tb, E)

    # Single fused MXU matmul, f32 accumulation.  Operands are cast to the
    # (possibly bf16) weight dtype; no-op when everything is f32.
    ag = jnp.dot(x.astype(w_ref.dtype), w_ref[...],
                 preferred_element_type=jnp.float32)      # (tb, 2*e_pad)
    ag = jnp.maximum(ag + b_ref[...], 0.0)                # bias + ReLU (VPU, f32)

    age = ag[:, :E]                                       # lane-aligned start 0
    gen = ag[:, e_pad:e_pad + E]                          # lane-aligned start e_pad

    idf = x.astype(jnp.float32) - age - gen

    id_ref[...] = idf.astype(id_ref.dtype)
    age_ref[...] = age.astype(age_ref.dtype)
    gen_ref[...] = gen.astype(gen_ref.dtype)


# --------------------------------------------------------------------------
# Tiling / VMEM heuristics
# --------------------------------------------------------------------------
def _vmem_capacity_bytes():
    try:
        return int(pltpu.get_tpu_info().vmem_capacity_bytes)
    except Exception:
        return 64 * 1024 * 1024        # conservative (v7x per-core)


def _choose_tile_b(B, E, e_pad, x_bytes, w_bytes, out_bytes, vmem_usable):
    # Grid-invariant weight/bias: fetched once but double-buffered by the
    # default pipeline, so count them twice.
    fixed = 2 * (E * 2 * e_pad * w_bytes + 2 * e_pad * 4)
    # Per row: double-buffered x tile + 3 double-buffered output tiles +
    # the f32 (row, 2*e_pad) matmul/ReLU intermediate + operand-cast slack.
    per_row = (2 * E * x_bytes
               + 3 * 2 * E * out_bytes
               + 2 * e_pad * 4
               + E * 4)
    avail = vmem_usable - fixed
    if avail <= per_row * 8:
        # TODO(synk): N-split the fused weight here for very large E on v7x.
        return 8, fixed, per_row
    max_rows = min(2048, max(8, (avail // per_row) // 8 * 8))
    if B <= max_rows:
        return _round_up(B, 8), fixed, per_row
    # Large batch: prefer an even number of grid steps so the "parallel"
    # batch axis splits evenly across v7x's two TensorCores.
    steps = _cdiv(B, max_rows)
    if steps % 2:
        steps += 1
    tile = max(8, _round_up(_cdiv(B, steps), 8))
    return tile, fixed, per_row


# --------------------------------------------------------------------------
# Wrapper
# --------------------------------------------------------------------------
def frfm_forward(embeddings, w_fused, b_fused, *, tile_b=None, out_dtype=None):
    """embeddings: [B, E]; (w_fused, b_fused) from frfm_prepare_params.

    Returns (id, age, gender), each [B, E].  out_dtype=bf16 halves the
    dominant HBM write traffic; the default preserves the input dtype so the
    residual decomposition matches the PyTorch module exactly.
    """
    B, E = embeddings.shape
    two_e_pad = w_fused.shape[1]
    e_pad = two_e_pad // 2
    assert w_fused.shape[0] == E and b_fused.shape == (1, two_e_pad)

    out_dtype = embeddings.dtype if out_dtype is None else jnp.dtype(out_dtype)
    x_bytes = jnp.dtype(embeddings.dtype).itemsize
    w_bytes = jnp.dtype(w_fused.dtype).itemsize
    out_bytes = jnp.dtype(out_dtype).itemsize

    capacity = _vmem_capacity_bytes()
    usable = max(capacity - 16 * 1024 * 1024, capacity // 2)  # compiler headroom

    if tile_b is None:
        tile_b, fixed, per_row = _choose_tile_b(
            B, E, e_pad, x_bytes, w_bytes, out_bytes, usable)
    else:
        tile_b = _round_up(min(tile_b, _round_up(B, 8)), 8)
        _, fixed, per_row = _choose_tile_b(
            B, E, e_pad, x_bytes, w_bytes, out_bytes, usable)

    grid = (pl.cdiv(B, tile_b),)

    x_spec = pl.BlockSpec((tile_b, E), lambda i: (i, 0))
    # Grid-invariant blocks: fetched once, resident in VMEM across the grid.
    w_spec = pl.BlockSpec((E, two_e_pad), lambda i: (0, 0))
    b_spec = pl.BlockSpec((1, two_e_pad), lambda i: (0, 0))
    out_spec = pl.BlockSpec((tile_b, E), lambda i: (i, 0))

    out_shapes = (
        jax.ShapeDtypeStruct((B, E), out_dtype),   # id
        jax.ShapeDtypeStruct((B, E), out_dtype),   # age
        jax.ShapeDtypeStruct((B, E), out_dtype),   # gender
    )

    cost = pl.CostEstimate(
        flops=int(2 * B * E * two_e_pad),
        transcendentals=0,
        bytes_accessed=int(B * E * x_bytes
                           + E * two_e_pad * w_bytes + two_e_pad * 4
                           + 3 * B * E * out_bytes),
    )

    # Accurate requirement (no double hedging), clamped under the physical
    # capacity minus headroom so compiler internal scratch always fits.
    vmem_needed = fixed + tile_b * per_row + 2 * 1024 * 1024
    vmem_limit = int(min(max(vmem_needed, 16 * 1024 * 1024), usable))

    kernel = functools.partial(frfm_kernel, E=E, e_pad=e_pad)

    return pl.pallas_call(
        kernel,
        out_shape=out_shapes,
        grid_spec=pltpu.PrefetchScalarGridSpec(
            num_scalar_prefetch=0,
            grid=grid,
            in_specs=[x_spec, w_spec, b_spec],
            out_specs=[out_spec, out_spec, out_spec],
        ),
        compiler_params=pltpu.CompilerParams(
            dimension_semantics=("parallel",),
            vmem_limit_bytes=vmem_limit),
        cost_estimate=cost,
    )(embeddings, w_fused, b_fused)


# --------------------------------------------------------------------------
# Reference + self-test
# --------------------------------------------------------------------------
def frfm_reference(x, w_age, b_age, w_gen, b_gen):
    age = jnp.maximum(x @ w_age.T + b_age, 0.0)
    gen = jnp.maximum(x @ w_gen.T + b_gen, 0.0)
    return x - age - gen, age, gen


if __name__ == "__main__":
    B, E = 16, 128   # small, lane-aligned shapes (module default is E=512)

    key = jax.random.PRNGKey(0)
    kx, kwa, kba, kwg, kbg = jax.random.split(key, 5)

    x = jax.random.normal(kx, (B, E), dtype=jnp.float32)
    bound = 1.0 / (E ** 0.5)
    w_age = jax.random.uniform(kwa, (E, E), jnp.float32, -bound, bound)
    b_age = jax.random.uniform(kba, (E,), jnp.float32, -bound, bound)
    w_gen = jax.random.uniform(kwg, (E, E), jnp.float32, -bound, bound)
    b_gen = jax.random.uniform(kbg, (E,), jnp.float32, -bound, bound)

    # One-time (hoisted) parameter fusion.
    w_fused, b_fused = frfm_prepare_params(w_age, b_age, w_gen, b_gen)

    # 1) Exact f32 path, batch a multiple of 8 (single tile).
    id_e, age_e, gen_e = frfm_forward(x, w_fused, b_fused)
    jax.block_until_ready((id_e, age_e, gen_e))
    id_r, age_r, gen_r = frfm_reference(x, w_age, b_age, w_gen, b_gen)
    assert jnp.allclose(id_e, id_r, atol=1e-4, rtol=1e-4)
    assert jnp.allclose(age_e, age_r, atol=1e-4, rtol=1e-4)
    assert jnp.allclose(gen_e, gen_r, atol=1e-4, rtol=1e-4)

    # 2) Ragged batch (13 rows): no pad/slice — masked last block.
    xb = x[:13]
    id_p, age_p, gen_p = frfm_forward(xb, w_fused, b_fused)
    jax.block_until_ready((id_p, age_p, gen_p))
    id_pr, age_pr, gen_pr = frfm_reference(xb, w_age, b_age, w_gen, b_gen)
    assert id_p.shape == (13, E)
    assert jnp.allclose(id_p, id_pr, atol=1e-4, rtol=1e-4)
    assert jnp.allclose(age_p, age_pr, atol=1e-4, rtol=1e-4)
    assert jnp.allclose(gen_p, gen_pr, atol=1e-4, rtol=1e-4)

    # 3) Recommended fast path: bf16 MXU operands + bf16 outputs (f32 accum).
    wb, bb = frfm_prepare_params(w_age, b_age, w_gen, b_gen,
                                 param_dtype=jnp.bfloat16)
    id_b, age_b, gen_b = frfm_forward(x, wb, bb, out_dtype=jnp.bfloat16)
    jax.block_until_ready((id_b, age_b, gen_b))
    assert id_b.dtype == jnp.bfloat16
    assert jnp.allclose(id_b.astype(jnp.float32), id_r, atol=1e-1, rtol=1e-1)
    assert jnp.allclose(age_b.astype(jnp.float32), age_r, atol=1e-1, rtol=1e-1)
    assert jnp.allclose(gen_b.astype(jnp.float32), gen_r, atol=1e-1, rtol=1e-1)

    print("KERNEL_OK")
</pallas_src>

<mosaic_0001>
module attributes {stable_mosaic.version = 11 : i64} {
  func.func @frfm_kernel(%arg0: i32, %arg1: memref<16x128xf32, #tpu.memory_space<vmem>>, %arg2: memref<128x256xf32, #tpu.memory_space<vmem>>, %arg3: memref<1x256xf32, #tpu.memory_space<vmem>>, %arg4: memref<16x128xf32, #tpu.memory_space<vmem>>, %arg5: memref<16x128xf32, #tpu.memory_space<vmem>>, %arg6: memref<16x128xf32, #tpu.memory_space<vmem>>) attributes {dimension_semantics = [#tpu.dimension_semantics<parallel>], iteration_bounds = array<i64: 1>, scalar_prefetch = 0 : i64, scratch_operands = 0 : i64, tpu.core_type = #tpu.core_type<tc>, window_params = [{transform_indices = @transform_0, window_bounds = array<i64: 16, 128>}, {pipeline_mode = #tpu.pipeline_mode<synchronous>, transform_indices = @transform_1, window_bounds = array<i64: 128, 256>}, {pipeline_mode = #tpu.pipeline_mode<synchronous>, transform_indices = @transform_2, window_bounds = array<i64: 1, 256>}, {transform_indices = @transform_3, window_bounds = array<i64: 16, 128>}, {transform_indices = @transform_4, window_bounds = array<i64: 16, 128>}, {transform_indices = @transform_5, window_bounds = array<i64: 16, 128>}]} {
    %c0 = arith.constant 0 : index
    %c0_0 = arith.constant 0 : index
    %0 = vector.load %arg1[%c0, %c0_0] : memref<16x128xf32, #tpu.memory_space<vmem>>, vector<16x128xf32>
    %c0_1 = arith.constant 0 : index
    %c0_2 = arith.constant 0 : index
    %1 = vector.load %arg2[%c0_1, %c0_2] : memref<128x256xf32, #tpu.memory_space<vmem>>, vector<128x256xf32>
    %cst = arith.constant dense<0.000000e+00> : vector<16x256xf32>
    %2 = tpu.matmul %0, %1, %cst {dimension_numbers = #tpu.dot_dimension_numbers<[1], [0], [0], [1], [0, 0, 1, 1], [], []>} : vector<16x128xf32>, vector<128x256xf32>, vector<16x256xf32> -> vector<16x256xf32>
    %c0_3 = arith.constant 0 : index
    %c0_4 = arith.constant 0 : index
    %3 = vector.load %arg3[%c0_3, %c0_4] : memref<1x256xf32, #tpu.memory_space<vmem>>, vector<1x256xf32>
    %4 = vector.broadcast %3 : vector<1x256xf32> to vector<16x256xf32>
    %5 = arith.addf %2, %4 : vector<16x256xf32>
    %cst_5 = arith.constant 0.000000e+00 : f32
    %6 = vector.broadcast %cst_5 : f32 to vector<16x256xf32>
    %7 = arith.maximumf %5, %6 : vector<16x256xf32>
    %8 = vector.extract_strided_slice %7 {offsets = [0, 0], sizes = [16, 128], strides = [1, 1]} : vector<16x256xf32> to vector<16x128xf32>
    %9 = vector.extract_strided_slice %7 {offsets = [0, 128], sizes = [16, 128], strides = [1, 1]} : vector<16x256xf32> to vector<16x128xf32>
    %10 = arith.subf %0, %8 : vector<16x128xf32>
    %11 = arith.subf %10, %9 : vector<16x128xf32>
    %c0_6 = arith.constant 0 : index
    %c0_7 = arith.constant 0 : index
    %12 = vector.load %arg4[%c0_6, %c0_7] : memref<16x128xf32, #tpu.memory_space<vmem>>, vector<16x128xf32>
    tpu.vector_store %arg4[%c0_6, %c0_7], %11 {strides = array<i32>} : memref<16x128xf32, #tpu.memory_space<vmem>>, vector<16x128xf32>,
    %c0_8 = arith.constant 0 : index
    %c0_9 = arith.constant 0 : index
    %13 = vector.load %arg5[%c0_8, %c0_9] : memref<16x128xf32, #tpu.memory_space<vmem>>, vector<16x128xf32>
    tpu.vector_store %arg5[%c0_8, %c0_9], %8 {strides = array<i32>} : memref<16x128xf32, #tpu.memory_space<vmem>>, vector<16x128xf32>,
    %c0_10 = arith.constant 0 : index
    %c0_11 = arith.constant 0 : index
    %14 = vector.load %arg6[%c0_10, %c0_11] : memref<16x128xf32, #tpu.memory_space<vmem>>, vector<16x128xf32>
    tpu.vector_store %arg6[%c0_10, %c0_11], %9 {strides = array<i32>} : memref<16x128xf32, #tpu.memory_space<vmem>>, vector<16x128xf32>,
    return
  }
  func.func @transform_0(%arg0: i32) -> (i32, i32) {
    %c0_i32 = arith.constant 0 : i32
    %c0_i32_0 = arith.constant 0 : i32
    return %arg0, %c0_i32 : i32, i32
  }
  func.func @transform_1(%arg0: i32) -> (i32, i32) {
    %c0_i32 = arith.constant 0 : i32
    %c0_i32_0 = arith.constant 0 : i32
    %c0_i32_1 = arith.constant 0 : i32
    return %c0_i32, %c0_i32_0 : i32, i32
  }
  func.func @transform_2(%arg0: i32) -> (i32, i32) {
    %c0_i32 = arith.constant 0 : i32
    %c0_i32_0 = arith.constant 0 : i32
    %c0_i32_1 = arith.constant 0 : i32
    return %c0_i32, %c0_i32_0 : i32, i32
  }
  func.func @transform_3(%arg0: i32) -> (i32, i32) {
    %c0_i32 = arith.constant 0 : i32
    %c0_i32_0 = arith.constant 0 : i32
    return %arg0, %c0_i32 : i32, i32
  }
  func.func @transform_4(%arg0: i32) -> (i32, i32) {
    %c0_i32 = arith.constant 0 : i32
    %c0_i32_0 = arith.constant 0 : i32
    return %arg0, %c0_i32 : i32, i32
  }
  func.func @transform_5(%arg0: i32) -> (i32, i32) {
    %c0_i32 = arith.constant 0 : i32
    %c0_i32_0 = arith.constant 0 : i32
    return %arg0, %c0_i32 : i32, i32
  }
}

</mosaic_0001>

<llo_original>
// kernel: tpu_custom_call.1
$region0: #{tpu_custom_call.1}
  #allocation0 [shape = 'u32[]', space=smem, size = 0x4, offset = 0x4, fixed_abs, tag = 'smem constant byte address 0x4 - core index']
  #allocation1 [shape = 'u32[72,128]{1,0:T(1,128)}', space=vmem, size = 0x9000, scoped, tag = 'internal scratch']
  %s0 = inlined_call_operand.hbm [shape: f32[16,128], index: 0, kind: input, shape index: {}]
  %s1 = inlined_call_operand.hbm [shape: f32[128,256], index: 1, kind: input, shape index: {}]
  %s2 = inlined_call_operand.hbm [shape: f32[1,256], index: 2, kind: input, shape index: {}]
  %s3 = inlined_call_operand.hbm [shape: f32[16,128], index: 3, kind: output, shape index: {0}]
  %s4 = inlined_call_operand.hbm [shape: f32[16,128], index: 4, kind: output, shape index: {1}]
  %s5 = inlined_call_operand.hbm [shape: f32[16,128], index: 5, kind: output, shape index: {2}]
  %6 = xla_tuple %s3, %s4, %s5
  %s7 = sld [smem:[#allocation0]]
  $region50: #{tpu_custom_call.1} parent=0
    _
  %s9 = ssub.s32 1, %s7
  %s10 = scalar_select 0, %s9, %s7
  $region1: #{tpu_custom_call.1} parent=0
    #allocation2 [shape = 'u8[8192]{0}', space=vmem, size = 0x2000, scoped, tag = 'input window, operand 0, single buffered']
    #allocation3 [shape = 's32[1]{0}', space=sflag, size = 0x4, scoped, tag = 'scoped memory for tpu_custom_call.1']
    #allocation4 [shape = 's32[1]{0}', space=sflag, size = 0x4, scoped, tag = 'scoped memory for tpu_custom_call.1']
    #allocation5 [shape = 'u8[131072]{0}', space=vmem, size = 0x20000, scoped, tag = 'input window, operand 1, single buffered']
    #allocation6 [shape = 's32[1]{0}', space=sflag, size = 0x4, scoped, tag = 'scoped memory for tpu_custom_call.1']
    #allocation7 [shape = 'u8[1024]{0}', space=vmem, size = 0x400, scoped, tag = 'input window, operand 2, single buffered']
    #allocation8 [shape = 'u8[8192]{0}', space=vmem, size = 0x2000, scoped, tag = 'output window, operand 0, single buffered']
    #allocation9 [shape = 'u8[8192]{0}', space=vmem, size = 0x2000, scoped, tag = 'output window, operand 1, single buffered']
    #allocation10 [shape = 's32[1]{0}', space=sflag, size = 0x4, scoped, tag = 'scoped memory for tpu_custom_call.1']
    #allocation11 [shape = 'u8[8192]{0}', space=vmem, size = 0x2000, scoped, tag = 'output window, operand 2, single buffered']
    %11 = vsyncpa [#allocation3], 0
    %12 = vsyncpa [#allocation6], 0
    %13 = vsyncpa [#allocation4], 0
    %14 = vsyncpa [#allocation10], 0
    // Predicated region
    $region2: #{tpu_custom_call.1} parent=1 // pred_check
      _
    $region3: #{tpu_custom_call.1} parent=1 // pred_check_branch
      %16 = sbr.rel (0) target = $region5
    $region4: #{tpu_custom_call.1} parent=1 // pred_region
      %18 = vsyncadd [#allocation3], 0
      %s19 = sshll.u32 %s0, 4
      %s20 = int_to_ptr.hbm [resolvable:$true] %s19
      %s21 = sshll.u32 [#allocation2], 4
      %s22 = int_to_ptr.vmem [resolvable:$true] %s21
      %27 = dma.hbm_to_vmem [thread:$0]  %s20, 256, %s22, [#allocation3], 128, 128, 8
    $region5: #{tpu_custom_call.1} parent=1 // pred_fallthru
      _
    // Predicated region
    $region6: #{tpu_custom_call.1} parent=1 // pred_check
      _
    $region7: #{tpu_custom_call.1} parent=1 // pred_check_branch
      %29 = sbr.rel (0) target = $region9
    $region8: #{tpu_custom_call.1} parent=1 // pred_region
      %31 = vsyncadd [#allocation6], 0
      %s32 = sshll.u32 %s1, 4
      %s33 = int_to_ptr.hbm [resolvable:$true] %s32
      %s34 = sshll.u32 [#allocation5], 4
      %s35 = int_to_ptr.vmem [resolvable:$true] %s34
      %40 = dma.hbm_to_vmem [thread:$0]  %s33, 4096, %s35, [#allocation6], 256, 256, 16
    $region9: #{tpu_custom_call.1} parent=1 // pred_fallthru
      _
    // Predicated region
    $region10: #{tpu_custom_call.1} parent=1 // pred_check
      _
    $region11: #{tpu_custom_call.1} parent=1 // pred_check_branch
      %42 = sbr.rel (0) target = $region13
    $region12: #{tpu_custom_call.1} parent=1 // pred_region
      %44 = vsyncadd [#allocation6], 0
      %s46 = sshll.u32 %s2, 4
      %s47 = int_to_ptr.hbm [resolvable:$true] %s46
      %s48 = sshll.u32 [#allocation7], 4
      %s49 = int_to_ptr.vmem [resolvable:$true] %s48
      %51 = dma.hbm_to_vmem [thread:$0]  %s47, 32, %s49, [#allocation6]
    $region13: #{tpu_custom_call.1} parent=1 // pred_fallthru
      _
    // Predicated region
    $region14: #{tpu_custom_call.1} parent=1 // pred_check
      _
    $region15: #{tpu_custom_call.1} parent=1 // pred_check_branch
      %53 = sbr.rel (0) target = $region17
    $region16: #{tpu_custom_call.1} parent=1 // pred_region
      %55 = dma.done [#allocation3], 256
    $region17: #{tpu_custom_call.1} parent=1 // pred_fallthru
      _
    // Predicated region
    $region18: #{tpu_custom_call.1} parent=1 // pred_check
      _
    $region19: #{tpu_custom_call.1} parent=1 // pred_check_branch
      %57 = sbr.rel (0) target = $region21
    $region20: #{tpu_custom_call.1} parent=1 // pred_region
      %59 = dma.done [#allocation6], 4096
    $region21: #{tpu_custom_call.1} parent=1 // pred_fallthru
      _
    // Predicated region
    $region22: #{tpu_custom_call.1} parent=1 // pred_check
      _
    $region23: #{tpu_custom_call.1} parent=1 // pred_check_branch
      %61 = sbr.rel (0) target = $region25
    $region24: #{tpu_custom_call.1} parent=1 // pred_region
      %63 = dma.done [#allocation6], 32
    $region25: #{tpu_custom_call.1} parent=1 // pred_fallthru
      _
    %v64 = vld [vmem:[#allocation2] sm:$0xff]
    %v65 = vld [vmem:[#allocation2 + $0x8] sm:$0xff]
    %v66 = vld [vmem:[#allocation5] sm:$0xff]
    %v67 = vld [vmem:[#allocation5 + $0x8] sm:$0xff]
    %v68 = vld [vmem:[#allocation5 + $0x10] sm:$0xff]
    %v69 = vld [vmem:[#allocation5 + $0x18] sm:$0xff]
    %v70 = vld [vmem:[#allocation5 + $0x20] sm:$0xff]
    %v71 = vld [vmem:[#allocation5 + $0x28] sm:$0xff]
    %v72 = vld [vmem:[#allocation5 + $0x30] sm:$0xff]
    %v73 = vld [vmem:[#allocation5 + $0x38] sm:$0xff]
    %v74 = vld [vmem:[#allocation5 + $0x40] sm:$0xff]
    %v75 = vld [vmem:[#allocation5 + $0x48] sm:$0xff]
    %v76 = vld [vmem:[#allocation5 + $0x50] sm:$0xff]
    %v77 = vld [vmem:[#allocation5 + $0x58] sm:$0xff]
    %v78 = vld [vmem:[#allocation5 + $0x60] sm:$0xff]
    %v79 = vld [vmem:[#allocation5 + $0x68] sm:$0xff]
    %v80 = vld [vmem:[#allocation5 + $0x70] sm:$0xff]
    %v81 = vld [vmem:[#allocation5 + $0x78] sm:$0xff]
    %v82 = vld [vmem:[#allocation5 + $0x80] sm:$0xff]
    %v83 = vld [vmem:[#allocation5 + $0x88] sm:$0xff]
    %v84 = vld [vmem:[#allocation5 + $0x90] sm:$0xff]
    %v85 = vld [vmem:[#allocation5 + $0x98] sm:$0xff]
    %v86 = vld [vmem:[#allocation5 + $0xa0] sm:$0xff]
    %v87 = vld [vmem:[#allocation5 + $0xa8] sm:$0xff]
    %v88 = vld [vmem:[#allocation5 + $0xb0] sm:$0xff]
    %v89 = vld [vmem:[#allocation5 + $0xb8] sm:$0xff]
    %v90 = vld [vmem:[#allocation5 + $0xc0] sm:$0xff]
    %v91 = vld [vmem:[#allocation5 + $0xc8] sm:$0xff]
    %v92 = vld [vmem:[#allocation5 + $0xd0] sm:$0xff]
    %v93 = vld [vmem:[#allocation5 + $0xd8] sm:$0xff]
    %v94 = vld [vmem:[#allocation5 + $0xe0] sm:$0xff]
    %v95 = vld [vmem:[#allocation5 + $0xe8] sm:$0xff]
    %v96 = vld [vmem:[#allocation5 + $0xf0] sm:$0xff]
    %v97 = vld [vmem:[#allocation5 + $0xf8] sm:$0xff]
    %v98 = vld [vmem:[#allocation7] sm:$0x3]
    %v100 = vperm.slane %v98, 0
    %v101 = vperm.slane %v98, 1
    %104 = vmatpush.msra.mxu0 %v96
    %105 = vmatpush.msra.mxu0 %v94
    %106 = vmatpush.msra.mxu0 %v92
    %107 = vmatpush.msra.mxu0 %v90
    %108 = vmatpush.msra.mxu0 %v88
    %109 = vmatpush.msra.mxu0 %v86
    %110 = vmatpush.msra.mxu0 %v84
    %111 = vmatpush.msra.mxu0 %v82
    %112 = vmatpush.msra.mxu0 %v80
    %113 = vmatpush.msra.mxu0 %v78
    %114 = vmatpush.msra.mxu0 %v76
    %115 = vmatpush.msra.mxu0 %v74
    %116 = vmatpush.msra.mxu0 %v72
    %117 = vmatpush.msra.mxu0 %v70
    %118 = vmatpush.msra.mxu0 %v68
    %119 = vmatpush.msra.mxu0 %v66
    %120 = vmatmul.f32.gmra.mxu0 %v64
    %v121 = vpop.f32.mrf.mxu0
    %v122 = vadd.f32 %v100, %v121
    %123 = vmatmul.f32.gmra.mxu0 %v65
    %v124 = vpop.f32.mrf.mxu0
    %v125 = vadd.f32 %v100, %v124
    %126 = vdwg.mxu0
    %127 = vmatpush.msra.mxu0 %v97
    %128 = vmatpush.msra.mxu0 %v95
    %129 = vmatpush.msra.mxu0 %v93
    %130 = vmatpush.msra.mxu0 %v91
    %131 = vmatpush.msra.mxu0 %v89
    %132 = vmatpush.msra.mxu0 %v87
    %133 = vmatpush.msra.mxu0 %v85
    %134 = vmatpush.msra.mxu0 %v83
    %135 = vmatpush.msra.mxu0 %v81
    %136 = vmatpush.msra.mxu0 %v79
    %137 = vmatpush.msra.mxu0 %v77
    %138 = vmatpush.msra.mxu0 %v75
    %139 = vmatpush.msra.mxu0 %v73
    %140 = vmatpush.msra.mxu0 %v71
    %141 = vmatpush.msra.mxu0 %v69
    %142 = vmatpush.msra.mxu0 %v67
    %143 = vmatmul.f32.gmra.mxu0 %v64
    %v144 = vpop.f32.mrf.mxu0
    %v145 = vadd.f32 %v101, %v144
    %146 = vmatmul.f32.gmra.mxu0 %v65
    %v147 = vpop.f32.mrf.mxu0
    %v148 = vadd.f32 %v101, %v147
    %149 = vdwg.mxu0
    %v150 = vmax.f32 %v122, 0.0
    %v151 = vmax.f32 %v145, 0.0
    %v152 = vmax.f32 %v125, 0.0
    %v153 = vmax.f32 %v148, 0.0
    %v154 = vsub.f32 %v64, %v150
    %v155 = vsub.f32 %v65, %v152
    %v156 = vsub.f32 %v154, %v151
    %v157 = vsub.f32 %v155, %v153
    %158 = vst [vmem:[#allocation8] sm:$0xff] %v156
    %159 = vst [vmem:[#allocation8 + $0x8] sm:$0xff] %v157
    %160 = vst [vmem:[#allocation9] sm:$0xff] %v150
    %161 = vst [vmem:[#allocation9 + $0x8] sm:$0xff] %v152
    %162 = vst [vmem:[#allocation11] sm:$0xff] %v151
    %163 = vst [vmem:[#allocation11 + $0x8] sm:$0xff] %v153
    // Predicated region
    $region26: #{tpu_custom_call.1} parent=1 // pred_check
      _
    $region27: #{tpu_custom_call.1} parent=1 // pred_check_branch
      %165 = sbr.rel (0) target = $region29
    $region28: #{tpu_custom_call.1} parent=1 // pred_region
      %167 = vsyncadd [#allocation4], 0
      %s168 = sshll.u32 [#allocation8], 4
      %s169 = int_to_ptr.vmem [resolvable:$true] %s168
      %s170 = sshll.u32 %s3, 4
      %s171 = int_to_ptr.hbm [resolvable:$true] %s170
      %176 = dma.vmem_to_hbm [thread:$0]  %s169, 256, %s171, [#allocation4], 128, 128, 8
    $region29: #{tpu_custom_call.1} parent=1 // pred_fallthru
      _
    // Predicated region
    $region30: #{tpu_custom_call.1} parent=1 // pred_check
      _
    $region31: #{tpu_custom_call.1} parent=1 // pred_check_branch
      %178 = sbr.rel (0) target = $region33
    $region32: #{tpu_custom_call.1} parent=1 // pred_region
      %180 = vsyncadd [#allocation10], 0
      %s181 = sshll.u32 [#allocation9], 4
      %s182 = int_to_ptr.vmem [resolvable:$true] %s181
      %s183 = sshll.u32 %s4, 4
      %s184 = int_to_ptr.hbm [resolvable:$true] %s183
      %189 = dma.vmem_to_hbm [thread:$0]  %s182, 256, %s184, [#allocation10], 128, 128, 8
    $region33: #{tpu_custom_call.1} parent=1 // pred_fallthru
      _
    // Predicated region
    $region34: #{tpu_custom_call.1} parent=1 // pred_check
      _
    $region35: #{tpu_custom_call.1} parent=1 // pred_check_branch
      %191 = sbr.rel (0) target = $region37
    $region36: #{tpu_custom_call.1} parent=1 // pred_region
      %193 = vsyncadd [#allocation10], 0
      %s194 = sshll.u32 [#allocation11], 4
      %s195 = int_to_ptr.vmem [resolvable:$true] %s194
      %s196 = sshll.u32 %s5, 4
      %s197 = int_to_ptr.hbm [resolvable:$true] %s196
      %202 = dma.vmem_to_hbm [thread:$0]  %s195, 256, %s197, [#allocation10], 128, 128, 8
    $region37: #{tpu_custom_call.1} parent=1 // pred_fallthru
      _
    // Predicated region
    $region38: #{tpu_custom_call.1} parent=1 // pred_check
      _
    $region39: #{tpu_custom_call.1} parent=1 // pred_check_branch
      %204 = sbr.rel (0) target = $region41
    $region40: #{tpu_custom_call.1} parent=1 // pred_region
      %206 = dma.done [#allocation4], 256
    $region41: #{tpu_custom_call.1} parent=1 // pred_fallthru
      _
    // Predicated region
    $region42: #{tpu_custom_call.1} parent=1 // pred_check
      _
    $region43: #{tpu_custom_call.1} parent=1 // pred_check_branch
      %208 = sbr.rel (0) target = $region45
    $region44: #{tpu_custom_call.1} parent=1 // pred_region
      %210 = dma.done [#allocation10], 256
    $region45: #{tpu_custom_call.1} parent=1 // pred_fallthru
      _
    // Predicated region
    $region46: #{tpu_custom_call.1} parent=1 // pred_check
      _
    $region47: #{tpu_custom_call.1} parent=1 // pred_check_branch
      %212 = sbr.rel (0) target = $region49
    $region48: #{tpu_custom_call.1} parent=1 // pred_region
      %214 = dma.done [#allocation10], 256
    $region49: #{tpu_custom_call.1} parent=1 // pred_fallthru
      _
    %215 = vsyncpa [#allocation3], 1
    %216 = vsyncpa [#allocation6], 1
    %217 = vsyncpa [#allocation4], 1
    %218 = vsyncpa [#allocation10], 1

</llo_original>
